<compile_context>
chip_gen: v7x
topology: tpu7x:2x2x1
jax: 0.10.0
libtpu: 0.0.40
codegen_flags: <defaults>
</compile_context>

<pallas_src>
import functools

import jax
import jax.numpy as jnp
import numpy as np
from jax.experimental import pallas as pl
from jax.experimental.pallas import tpu as pltpu

GAMMA = 12.0      # margin gamma
NUM_ELEM = 4      # E: size of each orthogonal sub-block
ENT_DIM = 32      # D: entity embedding dim (multiple of NUM_ELEM)
N_EDGES = 1024    # number of edges scored
TILE_N = 512      # edges per grid step (multiple of 128 -> lane dense)


def _round_up(x, m):
    return ((x + m - 1) // m) * m


# ----------------------------------------------------------------------------
# Pallas kernel: block-diagonal matvec + subtraction + per-block L2 + reduce.
# Everything is elementwise on (K, TILE_N) tiles (K = D/E = 8 sublanes,
# TILE_N lanes), so the whole kernel runs on the VPU (plus one EUP sqrt and
# one small cross-sublane sum) — appropriate for a memory-bound kernel.
# ----------------------------------------------------------------------------
def _ote_score_kernel(hh_ref, tt_ref, rr_ref, o_ref, *, num_elem, gamma):
    # hh_ref : (E, K, TN)     heads,  hh[e, k, n] = h[n, k*E + e]
    # tt_ref : (E, K, TN)     tails,  tt[j, k, n] = t[n, k*E + j]
    # rr_ref : (E, E, K, TN)  rel,    rr[e, j, k, n] = R[n, k, e, j]
    # o_ref  : (1, TN)        gamma - score   (lane-dense output slab)
    E = num_elem
    hh = [hh_ref[e] for e in range(E)]                 # E x (K, TN), small

    blk = None                                         # sum_j diff_j^2, (K, TN)
    for j in range(E):
        # out_j[k, n] = sum_e h[n, k*E+e] * R[n, k, e, j]
        acc = hh[0] * rr_ref[0, j]
        for e in range(1, E):
            acc = acc + hh[e] * rr_ref[e, j]
        d = acc - tt_ref[j]                            # diff along column j
        d2 = d * d
        blk = d2 if j == 0 else blk + d2

    norms = jnp.sqrt(blk)                              # per-block L2, (K, TN)
    o_ref[...] = gamma - jnp.sum(norms, axis=0, keepdims=True)   # (1, TN)


# ----------------------------------------------------------------------------
# Plain-JAX glue: Gram-Schmidt orthogonalization of the (E, E) relation blocks
# (matches OTEScore.orth_embedding / orth_rel_embedding for use_scale=False).
# ----------------------------------------------------------------------------
def _gram_schmidt_blocks(relations, num_elem):
    E = num_elem
    emb = relations.reshape(-1, E, E)                  # (B, E, E)
    u = [emb[:, 0]]
    uu = [jnp.sum(u[0] * u[0], axis=-1)]
    u_d = emb[:, 1:]
    for i in range(1, E):
        coef = jnp.sum(emb[:, i:] * u[i - 1][:, None, :], axis=-1) / uu[i - 1][:, None]
        u_d = u_d - u[-1][:, None, :] * coef[:, :, None]
        u_i = u_d[:, 0]
        u_d = u_d[:, 1:]
        uu.append(jnp.sum(u_i * u_i, axis=-1))
        u.append(u_i)
    u = jnp.stack(u, axis=1)                           # (B, E, E)
    return u / jnp.linalg.norm(u, axis=-1, keepdims=True)


def _orth_rel_embedding_soa(relations, num_elem, ent_dim):
    """Orthogonalize and emit directly in the kernel's (E, E, K, N) layout so
    the normalize + transpose fuse into a single HBM write (no extra pass)."""
    N = relations.shape[0]
    E = num_elem
    K = ent_dim // E
    u = _gram_schmidt_blocks(relations, E).reshape(N, K, E, E)
    return jnp.transpose(u, (2, 3, 1, 0))              # rr[e, j, k, n]


# ----------------------------------------------------------------------------
# Wrapper: layout transform + pallas_call
# ----------------------------------------------------------------------------
def ote_score(heads, relations, tails, *, gamma=GAMMA, num_elem=NUM_ELEM,
              tile_n=TILE_N):
    N, D = heads.shape
    E = num_elem
    K = D // E
    assert D % E == 0
    assert relations.shape == (N, D * E)
    assert tails.shape == (N, D)

    # Glue: Gram-Schmidt + structure-of-arrays re-layout (edges on lanes).
    rr = _orth_rel_embedding_soa(relations, E, D)                 # (E, E, K, N)
    hh = jnp.transpose(heads.reshape(N, K, E), (2, 1, 0))         # (E, K, N)
    tt = jnp.transpose(tails.reshape(N, K, E), (2, 1, 0))         # (E, K, N)

    # Tile / pad the lane (edge) axis to a multiple of a lane-dense tile.
    tile_n = min(tile_n, _round_up(N, 128))
    n_pad = _round_up(N, tile_n)
    if n_pad != N:
        pad = n_pad - N
        hh = jnp.pad(hh, ((0, 0), (0, 0), (0, pad)))
        tt = jnp.pad(tt, ((0, 0), (0, 0), (0, pad)))
        rr = jnp.pad(rr, ((0, 0), (0, 0), (0, 0), (0, pad)))

    kernel = functools.partial(_ote_score_kernel, num_elem=E, gamma=float(gamma))
    out = pl.pallas_call(
        kernel,
        out_shape=jax.ShapeDtypeStruct((1, n_pad), jnp.float32),
        grid_spec=pltpu.PrefetchScalarGridSpec(
            num_scalar_prefetch=0,
            grid=(n_pad // tile_n,),
            in_specs=[
                pl.BlockSpec((E, K, tile_n), lambda i: (0, 0, i)),        # hh
                pl.BlockSpec((E, K, tile_n), lambda i: (0, 0, i)),        # tt
                pl.BlockSpec((E, E, K, tile_n), lambda i: (0, 0, 0, i)),  # rr
            ],
            out_specs=pl.BlockSpec((1, tile_n), lambda i: (0, i)),
        ),
        compiler_params=pltpu.CompilerParams(
            dimension_semantics=("parallel",),
            vmem_limit_bytes=32 * 1024 * 1024,
        ),
    )(hh, tt, rr)
    return out[0, :N]


# ----------------------------------------------------------------------------
# Pure-JAX reference (mirrors the PyTorch score() math, all-f32 elementwise)
# ----------------------------------------------------------------------------
def ote_score_ref(heads, relations, tails, gamma, num_elem):
    N, D = heads.shape
    E = num_elem
    K = D // E
    u = _gram_schmidt_blocks(relations, E)             # (N*K, E, E)
    h = heads.reshape(N * K, E)
    out = jnp.sum(h[:, :, None] * u, axis=1).reshape(N, D)
    diff = out - tails
    norms = jnp.sqrt(jnp.sum(diff.reshape(N, K, E) ** 2, axis=-1))
    return gamma - jnp.sum(norms, axis=-1)


if __name__ == "__main__":
    key = jax.random.PRNGKey(0)
    kh, kr, kt = jax.random.split(key, 3)
    heads = jax.random.normal(kh, (N_EDGES, ENT_DIM), dtype=jnp.float32)
    tails = jax.random.normal(kt, (N_EDGES, ENT_DIM), dtype=jnp.float32)
    relations = jax.random.normal(kr, (N_EDGES, ENT_DIM * NUM_ELEM),
                                  dtype=jnp.float32)

    score_fn = jax.jit(functools.partial(
        ote_score, gamma=GAMMA, num_elem=NUM_ELEM, tile_n=TILE_N))
    scores = jax.block_until_ready(score_fn(heads, relations, tails))
    ref = jax.block_until_ready(
        ote_score_ref(heads, relations, tails, GAMMA, NUM_ELEM))

    assert scores.shape == (N_EDGES,)
    np.testing.assert_allclose(np.asarray(scores), np.asarray(ref),
                               rtol=1e-4, atol=1e-4)
    print("KERNEL_OK")
</pallas_src>

<mosaic_0001>
module attributes {stable_mosaic.version = 11 : i64} {
  func.func @_ote_score_kernel(%arg0: i32, %arg1: memref<4x8x512xf32, #tpu.memory_space<vmem>>, %arg2: memref<4x8x512xf32, #tpu.memory_space<vmem>>, %arg3: memref<4x4x8x512xf32, #tpu.memory_space<vmem>>, %arg4: memref<1x512xf32, #tpu.memory_space<vmem>>) attributes {dimension_semantics = [#tpu.dimension_semantics<parallel>], iteration_bounds = array<i64: 2>, scalar_prefetch = 0 : i64, scratch_operands = 0 : i64, tpu.core_type = #tpu.core_type<tc>, window_params = [{transform_indices = @transform_0, window_bounds = array<i64: 4, 8, 512>}, {transform_indices = @transform_1, window_bounds = array<i64: 4, 8, 512>}, {transform_indices = @transform_2, window_bounds = array<i64: 4, 4, 8, 512>}, {transform_indices = @transform_3, window_bounds = array<i64: 1, 512>}]} {
    %c0 = arith.constant 0 : index
    %c0_0 = arith.constant 0 : index
    %c0_1 = arith.constant 0 : index
    %0 = vector.load %arg1[%c0, %c0_0, %c0_1] : memref<4x8x512xf32, #tpu.memory_space<vmem>>, vector<1x8x512xf32>
    %1 = vector.shape_cast %0 : vector<1x8x512xf32> to vector<8x512xf32>
    %c1 = arith.constant 1 : index
    %c0_2 = arith.constant 0 : index
    %c0_3 = arith.constant 0 : index
    %2 = vector.load %arg1[%c1, %c0_2, %c0_3] : memref<4x8x512xf32, #tpu.memory_space<vmem>>, vector<1x8x512xf32>
    %3 = vector.shape_cast %2 : vector<1x8x512xf32> to vector<8x512xf32>
    %c2 = arith.constant 2 : index
    %c0_4 = arith.constant 0 : index
    %c0_5 = arith.constant 0 : index
    %4 = vector.load %arg1[%c2, %c0_4, %c0_5] : memref<4x8x512xf32, #tpu.memory_space<vmem>>, vector<1x8x512xf32>
    %5 = vector.shape_cast %4 : vector<1x8x512xf32> to vector<8x512xf32>
    %c3 = arith.constant 3 : index
    %c0_6 = arith.constant 0 : index
    %c0_7 = arith.constant 0 : index
    %6 = vector.load %arg1[%c3, %c0_6, %c0_7] : memref<4x8x512xf32, #tpu.memory_space<vmem>>, vector<1x8x512xf32>
    %7 = vector.shape_cast %6 : vector<1x8x512xf32> to vector<8x512xf32>
    %c0_8 = arith.constant 0 : index
    %c0_9 = arith.constant 0 : index
    %c0_10 = arith.constant 0 : index
    %c0_11 = arith.constant 0 : index
    %8 = vector.load %arg3[%c0_8, %c0_9, %c0_10, %c0_11] : memref<4x4x8x512xf32, #tpu.memory_space<vmem>>, vector<1x1x8x512xf32>
    %9 = vector.shape_cast %8 : vector<1x1x8x512xf32> to vector<8x512xf32>
    %10 = arith.mulf %1, %9 : vector<8x512xf32>
    %c1_12 = arith.constant 1 : index
    %c0_13 = arith.constant 0 : index
    %c0_14 = arith.constant 0 : index
    %c0_15 = arith.constant 0 : index
    %11 = vector.load %arg3[%c1_12, %c0_13, %c0_14, %c0_15] : memref<4x4x8x512xf32, #tpu.memory_space<vmem>>, vector<1x1x8x512xf32>
    %12 = vector.shape_cast %11 : vector<1x1x8x512xf32> to vector<8x512xf32>
    %13 = arith.mulf %3, %12 : vector<8x512xf32>
    %14 = arith.addf %10, %13 : vector<8x512xf32>
    %c2_16 = arith.constant 2 : index
    %c0_17 = arith.constant 0 : index
    %c0_18 = arith.constant 0 : index
    %c0_19 = arith.constant 0 : index
    %15 = vector.load %arg3[%c2_16, %c0_17, %c0_18, %c0_19] : memref<4x4x8x512xf32, #tpu.memory_space<vmem>>, vector<1x1x8x512xf32>
    %16 = vector.shape_cast %15 : vector<1x1x8x512xf32> to vector<8x512xf32>
    %17 = arith.mulf %5, %16 : vector<8x512xf32>
    %18 = arith.addf %14, %17 : vector<8x512xf32>
    %c3_20 = arith.constant 3 : index
    %c0_21 = arith.constant 0 : index
    %c0_22 = arith.constant 0 : index
    %c0_23 = arith.constant 0 : index
    %19 = vector.load %arg3[%c3_20, %c0_21, %c0_22, %c0_23] : memref<4x4x8x512xf32, #tpu.memory_space<vmem>>, vector<1x1x8x512xf32>
    %20 = vector.shape_cast %19 : vector<1x1x8x512xf32> to vector<8x512xf32>
    %21 = arith.mulf %7, %20 : vector<8x512xf32>
    %22 = arith.addf %18, %21 : vector<8x512xf32>
    %c0_24 = arith.constant 0 : index
    %c0_25 = arith.constant 0 : index
    %c0_26 = arith.constant 0 : index
    %23 = vector.load %arg2[%c0_24, %c0_25, %c0_26] : memref<4x8x512xf32, #tpu.memory_space<vmem>>, vector<1x8x512xf32>
    %24 = vector.shape_cast %23 : vector<1x8x512xf32> to vector<8x512xf32>
    %25 = arith.subf %22, %24 : vector<8x512xf32>
    %26 = arith.mulf %25, %25 : vector<8x512xf32>
    %c0_27 = arith.constant 0 : index
    %c1_28 = arith.constant 1 : index
    %c0_29 = arith.constant 0 : index
    %c0_30 = arith.constant 0 : index
    %27 = vector.load %arg3[%c0_27, %c1_28, %c0_29, %c0_30] : memref<4x4x8x512xf32, #tpu.memory_space<vmem>>, vector<1x1x8x512xf32>
    %28 = vector.shape_cast %27 : vector<1x1x8x512xf32> to vector<8x512xf32>
    %29 = arith.mulf %1, %28 : vector<8x512xf32>
    %c1_31 = arith.constant 1 : index
    %c1_32 = arith.constant 1 : index
    %c0_33 = arith.constant 0 : index
    %c0_34 = arith.constant 0 : index
    %30 = vector.load %arg3[%c1_31, %c1_32, %c0_33, %c0_34] : memref<4x4x8x512xf32, #tpu.memory_space<vmem>>, vector<1x1x8x512xf32>
    %31 = vector.shape_cast %30 : vector<1x1x8x512xf32> to vector<8x512xf32>
    %32 = arith.mulf %3, %31 : vector<8x512xf32>
    %33 = arith.addf %29, %32 : vector<8x512xf32>
    %c2_35 = arith.constant 2 : index
    %c1_36 = arith.constant 1 : index
    %c0_37 = arith.constant 0 : index
    %c0_38 = arith.constant 0 : index
    %34 = vector.load %arg3[%c2_35, %c1_36, %c0_37, %c0_38] : memref<4x4x8x512xf32, #tpu.memory_space<vmem>>, vector<1x1x8x512xf32>
    %35 = vector.shape_cast %34 : vector<1x1x8x512xf32> to vector<8x512xf32>
    %36 = arith.mulf %5, %35 : vector<8x512xf32>
    %37 = arith.addf %33, %36 : vector<8x512xf32>
    %c3_39 = arith.constant 3 : index
    %c1_40 = arith.constant 1 : index
    %c0_41 = arith.constant 0 : index
    %c0_42 = arith.constant 0 : index
    %38 = vector.load %arg3[%c3_39, %c1_40, %c0_41, %c0_42] : memref<4x4x8x512xf32, #tpu.memory_space<vmem>>, vector<1x1x8x512xf32>
    %39 = vector.shape_cast %38 : vector<1x1x8x512xf32> to vector<8x512xf32>
    %40 = arith.mulf %7, %39 : vector<8x512xf32>
    %41 = arith.addf %37, %40 : vector<8x512xf32>
    %c1_43 = arith.constant 1 : index
    %c0_44 = arith.constant 0 : index
    %c0_45 = arith.constant 0 : index
    %42 = vector.load %arg2[%c1_43, %c0_44, %c0_45] : memref<4x8x512xf32, #tpu.memory_space<vmem>>, vector<1x8x512xf32>
    %43 = vector.shape_cast %42 : vector<1x8x512xf32> to vector<8x512xf32>
    %44 = arith.subf %41, %43 : vector<8x512xf32>
    %45 = arith.mulf %44, %44 : vector<8x512xf32>
    %46 = arith.addf %26, %45 : vector<8x512xf32>
    %c0_46 = arith.constant 0 : index
    %c2_47 = arith.constant 2 : index
    %c0_48 = arith.constant 0 : index
    %c0_49 = arith.constant 0 : index
    %47 = vector.load %arg3[%c0_46, %c2_47, %c0_48, %c0_49] : memref<4x4x8x512xf32, #tpu.memory_space<vmem>>, vector<1x1x8x512xf32>
    %48 = vector.shape_cast %47 : vector<1x1x8x512xf32> to vector<8x512xf32>
    %49 = arith.mulf %1, %48 : vector<8x512xf32>
    %c1_50 = arith.constant 1 : index
    %c2_51 = arith.constant 2 : index
    %c0_52 = arith.constant 0 : index
    %c0_53 = arith.constant 0 : index
    %50 = vector.load %arg3[%c1_50, %c2_51, %c0_52, %c0_53] : memref<4x4x8x512xf32, #tpu.memory_space<vmem>>, vector<1x1x8x512xf32>
    %51 = vector.shape_cast %50 : vector<1x1x8x512xf32> to vector<8x512xf32>
    %52 = arith.mulf %3, %51 : vector<8x512xf32>
    %53 = arith.addf %49, %52 : vector<8x512xf32>
    %c2_54 = arith.constant 2 : index
    %c2_55 = arith.constant 2 : index
    %c0_56 = arith.constant 0 : index
    %c0_57 = arith.constant 0 : index
    %54 = vector.load %arg3[%c2_54, %c2_55, %c0_56, %c0_57] : memref<4x4x8x512xf32, #tpu.memory_space<vmem>>, vector<1x1x8x512xf32>
    %55 = vector.shape_cast %54 : vector<1x1x8x512xf32> to vector<8x512xf32>
    %56 = arith.mulf %5, %55 : vector<8x512xf32>
    %57 = arith.addf %53, %56 : vector<8x512xf32>
    %c3_58 = arith.constant 3 : index
    %c2_59 = arith.constant 2 : index
    %c0_60 = arith.constant 0 : index
    %c0_61 = arith.constant 0 : index
    %58 = vector.load %arg3[%c3_58, %c2_59, %c0_60, %c0_61] : memref<4x4x8x512xf32, #tpu.memory_space<vmem>>, vector<1x1x8x512xf32>
    %59 = vector.shape_cast %58 : vector<1x1x8x512xf32> to vector<8x512xf32>
    %60 = arith.mulf %7, %59 : vector<8x512xf32>
    %61 = arith.addf %57, %60 : vector<8x512xf32>
    %c2_62 = arith.constant 2 : index
    %c0_63 = arith.constant 0 : index
    %c0_64 = arith.constant 0 : index
    %62 = vector.load %arg2[%c2_62, %c0_63, %c0_64] : memref<4x8x512xf32, #tpu.memory_space<vmem>>, vector<1x8x512xf32>
    %63 = vector.shape_cast %62 : vector<1x8x512xf32> to vector<8x512xf32>
    %64 = arith.subf %61, %63 : vector<8x512xf32>
    %65 = arith.mulf %64, %64 : vector<8x512xf32>
    %66 = arith.addf %46, %65 : vector<8x512xf32>
    %c0_65 = arith.constant 0 : index
    %c3_66 = arith.constant 3 : index
    %c0_67 = arith.constant 0 : index
    %c0_68 = arith.constant 0 : index
    %67 = vector.load %arg3[%c0_65, %c3_66, %c0_67, %c0_68] : memref<4x4x8x512xf32, #tpu.memory_space<vmem>>, vector<1x1x8x512xf32>
    %68 = vector.shape_cast %67 : vector<1x1x8x512xf32> to vector<8x512xf32>
    %69 = arith.mulf %1, %68 : vector<8x512xf32>
    %c1_69 = arith.constant 1 : index
    %c3_70 = arith.constant 3 : index
    %c0_71 = arith.constant 0 : index
    %c0_72 = arith.constant 0 : index
    %70 = vector.load %arg3[%c1_69, %c3_70, %c0_71, %c0_72] : memref<4x4x8x512xf32, #tpu.memory_space<vmem>>, vector<1x1x8x512xf32>
    %71 = vector.shape_cast %70 : vector<1x1x8x512xf32> to vector<8x512xf32>
    %72 = arith.mulf %3, %71 : vector<8x512xf32>
    %73 = arith.addf %69, %72 : vector<8x512xf32>
    %c2_73 = arith.constant 2 : index
    %c3_74 = arith.constant 3 : index
    %c0_75 = arith.constant 0 : index
    %c0_76 = arith.constant 0 : index
    %74 = vector.load %arg3[%c2_73, %c3_74, %c0_75, %c0_76] : memref<4x4x8x512xf32, #tpu.memory_space<vmem>>, vector<1x1x8x512xf32>
    %75 = vector.shape_cast %74 : vector<1x1x8x512xf32> to vector<8x512xf32>
    %76 = arith.mulf %5, %75 : vector<8x512xf32>
    %77 = arith.addf %73, %76 : vector<8x512xf32>
    %c3_77 = arith.constant 3 : index
    %c3_78 = arith.constant 3 : index
    %c0_79 = arith.constant 0 : index
    %c0_80 = arith.constant 0 : index
    %78 = vector.load %arg3[%c3_77, %c3_78, %c0_79, %c0_80] : memref<4x4x8x512xf32, #tpu.memory_space<vmem>>, vector<1x1x8x512xf32>
    %79 = vector.shape_cast %78 : vector<1x1x8x512xf32> to vector<8x512xf32>
    %80 = arith.mulf %7, %79 : vector<8x512xf32>
    %81 = arith.addf %77, %80 : vector<8x512xf32>
    %c3_81 = arith.constant 3 : index
    %c0_82 = arith.constant 0 : index
    %c0_83 = arith.constant 0 : index
    %82 = vector.load %arg2[%c3_81, %c0_82, %c0_83] : memref<4x8x512xf32, #tpu.memory_space<vmem>>, vector<1x8x512xf32>
    %83 = vector.shape_cast %82 : vector<1x8x512xf32> to vector<8x512xf32>
    %84 = arith.subf %81, %83 : vector<8x512xf32>
    %85 = arith.mulf %84, %84 : vector<8x512xf32>
    %86 = arith.addf %66, %85 : vector<8x512xf32>
    %87 = math.sqrt %86 : vector<8x512xf32>
    %cst = arith.constant dense<0.000000e+00> : vector<512xf32>
    %88 = vector.multi_reduction <add>, %87, %cst [0] : vector<8x512xf32> to vector<512xf32>
    %89 = vector.shape_cast %88 : vector<512xf32> to vector<1x512xf32>
    %cst_84 = arith.constant 1.200000e+01 : f32
    %90 = vector.broadcast %cst_84 : f32 to vector<1x512xf32>
    %91 = arith.subf %90, %89 : vector<1x512xf32>
    %c0_85 = arith.constant 0 : index
    %c0_86 = arith.constant 0 : index
    %92 = vector.load %arg4[%c0_85, %c0_86] : memref<1x512xf32, #tpu.memory_space<vmem>>, vector<1x512xf32>
    tpu.vector_store %arg4[%c0_85, %c0_86], %91 {strides = array<i32>} : memref<1x512xf32, #tpu.memory_space<vmem>>, vector<1x512xf32>,
    return
  }
  func.func @transform_0(%arg0: i32) -> (i32, i32, i32) {
    %c0_i32 = arith.constant 0 : i32
    %c0_i32_0 = arith.constant 0 : i32
    %c0_i32_1 = arith.constant 0 : i32
    return %c0_i32, %c0_i32_0, %arg0 : i32, i32, i32
  }
  func.func @transform_1(%arg0: i32) -> (i32, i32, i32) {
    %c0_i32 = arith.constant 0 : i32
    %c0_i32_0 = arith.constant 0 : i32
    %c0_i32_1 = arith.constant 0 : i32
    return %c0_i32, %c0_i32_0, %arg0 : i32, i32, i32
  }
  func.func @transform_2(%arg0: i32) -> (i32, i32, i32, i32) {
    %c0_i32 = arith.constant 0 : i32
    %c0_i32_0 = arith.constant 0 : i32
    %c0_i32_1 = arith.constant 0 : i32
    %c0_i32_2 = arith.constant 0 : i32
    return %c0_i32, %c0_i32_0, %c0_i32_1, %arg0 : i32, i32, i32, i32
  }
  func.func @transform_3(%arg0: i32) -> (i32, i32) {
    %c0_i32 = arith.constant 0 : i32
    %c0_i32_0 = arith.constant 0 : i32
    return %c0_i32, %arg0 : i32, i32
  }
}

</mosaic_0001>

<llo_original>
// kernel: div.27
$region0: #{div.27}
  #allocation0 [shape = 's32[1]{0}', space=sflag, size = 0x4, scoped, tag = 'scoped memory for div.27']
  %s0 = inlined_call_operand.vmem [shape: f32[8192], index: 0, kind: input, shape index: {}]
  %s1 = inlined_call_operand.vmem [shape: f32[8192], index: 1, kind: input, shape index: {}]
  %s2 = inlined_call_operand.vmem [shape: f32[8192], index: 2, kind: output, shape index: {}]
  %v3 = vld [vmem:[%s0] sm:$0xff]
  %v4 = vld [vmem:[%s1] sm:$0xff]
  %5 = xla_tuple %v3, %v4
  %6 = xla_tuple %5
  %v7 = vrcp.pop %v4
  %v8 = vmul.f32 %v3, %v7
  %9 = xla_tuple %v8
  %10 = vst [vmem:[%s2] sm:$0xff] %v8
  %s11 = scalar_lea.vmem %s0, 8
  %v12 = vld [vmem:[%s11] sm:$0xff]
  %s13 = scalar_lea.vmem %s1, 8
  %v14 = vld [vmem:[%s13] sm:$0xff]
  %15 = xla_tuple %v12, %v14
  %16 = xla_tuple %15
  %v17 = vrcp.pop %v14
  %v18 = vmul.f32 %v12, %v17
  %19 = xla_tuple %v18
  %s20 = scalar_lea.vmem %s2, 8
  %21 = vst [vmem:[%s20] sm:$0xff] %v18
  %s22 = scalar_lea.vmem %s0, 16
  %v23 = vld [vmem:[%s22] sm:$0xff]
  %s24 = scalar_lea.vmem %s1, 16
  %v25 = vld [vmem:[%s24] sm:$0xff]
  %26 = xla_tuple %v23, %v25
  %27 = xla_tuple %26
  %v28 = vrcp.pop %v25
  %v29 = vmul.f32 %v23, %v28
  %30 = xla_tuple %v29
  %s31 = scalar_lea.vmem %s2, 16
  %32 = vst [vmem:[%s31] sm:$0xff] %v29
  %s33 = scalar_lea.vmem %s0, 24
  %v34 = vld [vmem:[%s33] sm:$0xff]
  %s35 = scalar_lea.vmem %s1, 24
  %v36 = vld [vmem:[%s35] sm:$0xff]
  %37 = xla_tuple %v34, %v36
  %38 = xla_tuple %37
  %v39 = vrcp.pop %v36
  %v40 = vmul.f32 %v34, %v39
  %41 = xla_tuple %v40
  %s42 = scalar_lea.vmem %s2, 24
  %43 = vst [vmem:[%s42] sm:$0xff] %v40
  %s44 = scalar_lea.vmem %s0, 32
  %v45 = vld [vmem:[%s44] sm:$0xff]
  %s46 = scalar_lea.vmem %s1, 32
  %v47 = vld [vmem:[%s46] sm:$0xff]
  %48 = xla_tuple %v45, %v47
  %49 = xla_tuple %48
  %v50 = vrcp.pop %v47
  %v51 = vmul.f32 %v45, %v50
  %52 = xla_tuple %v51
  %s53 = scalar_lea.vmem %s2, 32
  %54 = vst [vmem:[%s53] sm:$0xff] %v51
  %s55 = scalar_lea.vmem %s0, 40
  %v56 = vld [vmem:[%s55] sm:$0xff]
  %s57 = scalar_lea.vmem %s1, 40
  %v58 = vld [vmem:[%s57] sm:$0xff]
  %59 = xla_tuple %v56, %v58
  %60 = xla_tuple %59
  %v61 = vrcp.pop %v58
  %v62 = vmul.f32 %v56, %v61
  %63 = xla_tuple %v62
  %s64 = scalar_lea.vmem %s2, 40
  %65 = vst [vmem:[%s64] sm:$0xff] %v62
  %s66 = scalar_lea.vmem %s0, 48
  %v67 = vld [vmem:[%s66] sm:$0xff]
  %s68 = scalar_lea.vmem %s1, 48
  %v69 = vld [vmem:[%s68] sm:$0xff]
  %70 = xla_tuple %v67, %v69
  %71 = xla_tuple %70
  %v72 = vrcp.pop %v69
  %v73 = vmul.f32 %v67, %v72
  %74 = xla_tuple %v73
  %s75 = scalar_lea.vmem %s2, 48
  %76 = vst [vmem:[%s75] sm:$0xff] %v73
  %s77 = scalar_lea.vmem %s0, 56
  %v78 = vld [vmem:[%s77] sm:$0xff]
  %s79 = scalar_lea.vmem %s1, 56
  %v80 = vld [vmem:[%s79] sm:$0xff]
  %81 = xla_tuple %v78, %v80
  %82 = xla_tuple %81
  %v83 = vrcp.pop %v80
  %v84 = vmul.f32 %v78, %v83
  %85 = xla_tuple %v84
  %s86 = scalar_lea.vmem %s2, 56
  %87 = vst [vmem:[%s86] sm:$0xff] %v84

// kernel: ote_score.1
$region0: #{ote_score.1}
  #allocation0 [shape = 'u32[]', space=smem, size = 0x4, offset = 0x4, fixed_abs, tag = 'smem constant byte address 0x4 - core index']
  #allocation1 [shape = 'u32[144,128]{1,0:T(1,128)}', space=vmem, size = 0x12000, scoped, tag = 'internal scratch']
  %s0 = inlined_call_operand.vmem [shape: f32[4,8,1024], index: 0, kind: input, shape index: {}]
  %s1 = inlined_call_operand.vmem [shape: f32[4,8,1024], index: 1, kind: input, shape index: {}]
  %s2 = inlined_call_operand.vmem [shape: f32[4,4,8,1024], index: 2, kind: input, shape index: {}]
  %s3 = inlined_call_operand.hbm [shape: f32[1,1024], index: 3, kind: output, shape index: {}]
  %s4 = sld [smem:[#allocation0]]
  $region114: #{ote_score.1} parent=0
    _
  %s6 = ssub.s32 1, %s4
  %s7 = scalar_select 0, %s6, %s4
  $region1: #{ote_score.1} parent=0
    #allocation2 [shape = 'u8[131072]{0}', space=vmem, size = 0x20000, scoped, tag = 'input window, operand 0']
    #allocation3 [shape = 'u8[131072]{0}', space=vmem, size = 0x20000, scoped, tag = 'input window, operand 1']
    #allocation4 [shape = 'u8[524288]{0}', space=vmem, size = 0x80000, scoped, tag = 'input window, operand 2']
    #allocation5 [shape = 'u8[4096]{0}', space=vmem, size = 0x1000, scoped, tag = 'output window, operand 0']
    #allocation6 [shape = 's32[2]{0}', space=sflag, size = 0x8, scoped, tag = 'scoped memory for ote_score.1']
    %8 = vsyncpa [#allocation6], 0
    %s9 = scalar_lea.sflag [#allocation6], 1
    %10 = vsyncpa %s9, 0
    loop: start=0, step=1, limit=4
    $region2: #{ote_score.1} parent=1 // loop_pre_header
      _
    $region3: #{ote_score.1} parent=1 // loop_header
      %s12 = sphi 0, %s16
      %p13 = scmp.ge.s32.totalorder %s12, 4
      %s22 = sphi 0, %s24
      %s25 = sphi 0, %s22
      %s26 = sphi 0, %s25
      %s42 = sphi 0, %s26
      %s48 = sphi 0, %s50
      %s51 = sphi 0, %s48
      %s52 = sphi 0, %s51
      %s68 = sphi 0, %s52
      %s74 = sphi 0, %s76
      %s77 = sphi 0, %s74
      %s78 = sphi 0, %s77
      %s94 = sphi 0, %s78
      %s100 = sphi 0, %s102
      %s103 = sphi 0, %s100
      %s104 = sphi 0, %s103
      %s120 = sphi 0, %s104
    $region4: #{ote_score.1} parent=1 // loop_header_branch
      %15 = sbr.rel (%p13) target = $region8
    $region5: #{ote_score.1} parent=1 // loop_body
      %s17 = ssub.s32 %s12, 1
      %s18 = ssub.s32 %s12, 2
      %s19 = sadd.s32 %s12, 1
      %s20 = ssub.s32 %s12, %s19
      %p21 = scmp.eq.s32.totalorder %s20, 0
      %s23 = sadd.s32 %s22, 1
      %s24 = scalar_select %p21, %s22, %s23
      %p27 = pneg %p21
      %p28 = scmp.eq.s32.totalorder %s12, 1
      %p29 = por %p27, %p28
      %p30 = scmp.ne.s32.totalorder %s22, %s25
      %p31 = scmp.eq.s32.totalorder %s12, 0
      %p32 = por %p30, %p31
      %p33 = scmp.ne.s32.totalorder %s22, %s25
      %p34 = scmp.eq.s32.totalorder %s17, 1
      %p35 = por %p33, %p34
      %p36 = scmp.ne.s32.totalorder %s25, %s26
      %p37 = scmp.eq.s32.totalorder %s17, 0
      %p38 = por %p36, %p37
      %p39 = scmp.ne.s32.totalorder %s25, %s26
      %p40 = scmp.eq.s32.totalorder %s18, 1
      %p41 = por %p39, %p40
      %p43 = scmp.ne.s32.totalorder %s26, %s42
      %p44 = scmp.eq.s32.totalorder %s18, 0
      %p45 = por %p43, %p44
      %s46 = ssub.s32 %s12, %s19
      %p47 = scmp.eq.s32.totalorder %s46, 0
      %s49 = sadd.s32 %s48, 1
      %s50 = scalar_select %p47, %s48, %s49
      %p53 = pneg %p47
      %p54 = scmp.eq.s32.totalorder %s12, 1
      %p55 = por %p53, %p54
      %p56 = scmp.ne.s32.totalorder %s48, %s51
      %p57 = scmp.eq.s32.totalorder %s12, 0
      %p58 = por %p56, %p57
      %p59 = scmp.ne.s32.totalorder %s48, %s51
      %p60 = scmp.eq.s32.totalorder %s17, 1
      %p61 = por %p59, %p60
      %p62 = scmp.ne.s32.totalorder %s51, %s52
      %p63 = scmp.eq.s32.totalorder %s17, 0
      %p64 = por %p62, %p63
      %p65 = scmp.ne.s32.totalorder %s51, %s52
      %p66 = scmp.eq.s32.totalorder %s18, 1
      %p67 = por %p65, %p66
      %p69 = scmp.ne.s32.totalorder %s52, %s68
      %p70 = scmp.eq.s32.totalorder %s18, 0
      %p71 = por %p69, %p70
      %s72 = ssub.s32 %s12, %s19
      %p73 = scmp.eq.s32.totalorder %s72, 0
      %s75 = sadd.s32 %s74, 1
      %s76 = scalar_select %p73, %s74, %s75
      %p79 = pneg %p73
      %p80 = scmp.eq.s32.totalorder %s12, 1
      %p81 = por %p79, %p80
      %p82 = scmp.ne.s32.totalorder %s74, %s77
      %p83 = scmp.eq.s32.totalorder %s12, 0
      %p84 = por %p82, %p83
      %p85 = scmp.ne.s32.totalorder %s74, %s77
      %p86 = scmp.eq.s32.totalorder %s17, 1
      %p87 = por %p85, %p86
      %p88 = scmp.ne.s32.totalorder %s77, %s78
      %p89 = scmp.eq.s32.totalorder %s17, 0
      %p90 = por %p88, %p89
      %p91 = scmp.ne.s32.totalorder %s77, %s78
      %p92 = scmp.eq.s32.totalorder %s18, 1
      %p93 = por %p91, %p92
      %p95 = scmp.ne.s32.totalorder %s78, %s94
      %p96 = scmp.eq.s32.totalorder %s18, 0
      %p97 = por %p95, %p96
      %s98 = ssub.s32 %s12, %s19
      %p99 = scmp.eq.s32.totalorder %s98, 0
      %s101 = sadd.s32 %s100, 1
      %s102 = scalar_select %p99, %s100, %s101
      %p105 = pneg %p99
      %p106 = scmp.eq.s32.totalorder %s12, 1
      %p107 = por %p105, %p106
      %p108 = scmp.ne.s32.totalorder %s100, %s103
      %p109 = scmp.eq.s32.totalorder %s12, 0
      %p110 = por %p108, %p109
      %p111 = scmp.ne.s32.totalorder %s100, %s103
      %p112 = scmp.eq.s32.totalorder %s17, 1
      %p113 = por %p111, %p112
      %p114 = scmp.ne.s32.totalorder %s103, %s104
      %p115 = scmp.eq.s32.totalorder %s17, 0
      %p116 = por %p114, %p115
      %p117 = scmp.ne.s32.totalorder %s103, %s104
      %p118 = scmp.eq.s32.totalorder %s18, 1
      %p119 = por %p117, %p118
      %p121 = scmp.ne.s32.totalorder %s104, %s120
      %p122 = scmp.eq.s32.totalorder %s18, 0
      %p123 = por %p121, %p122
      %p124 = scmp.le.s32.totalorder 1, %s12
      %p125 = scmp.lt.s32.totalorder %s12, 3
      %p126 = pnand %p124, %p125
      %p127 = pneg %p126
      // Predicated region
      $region9: #{ote_score.1} parent=5 // pred_check
        _
      $region10: #{ote_score.1} parent=5 // pred_check_branch
        %129 = sbr.rel (%p126) target = $region12
      $region11: #{ote_score.1} parent=5 // pred_region
        %s130 = ssub.s32 %s12, 1
      $region12: #{ote_score.1} parent=5 // pred_fallthru
        _
      %p131 = scmp.lt.s32.totalorder %s12, 2
      // Predicated region
      $region13: #{ote_score.1} parent=5 // pred_check
        %p132 = pneg %p131
      $region14: #{ote_score.1} parent=5 // pred_check_branch
        %134 = sbr.rel (%p132) target = $region16
      $region15: #{ote_score.1} parent=5 // pred_region
        // Predicated region
        $region17: #{ote_score.1} parent=15 // pred_check
          %p135 = pneg %p32
        $region18: #{ote_score.1} parent=15 // pred_check_branch
          %137 = sbr.rel (%p135) target = $region20
        $region19: #{ote_score.1} parent=15 // pred_region
          %s138 = sand.u32 %s22, 1
          %s139 = sand.u32 %s22, 1
          %s140 = smul.addr %s139, 128
          %s141 = scalar_lea.vmem [#allocation2], %s140
          %s142 = smul.u32 4, %s12
          %s143 = smul.addr %s142, 8
          %s144 = scalar_lea.vmem %s0, %s143
          // Predicated region
          $region21: #{ote_score.1} parent=19 // pred_check
            _
          $region22: #{ote_score.1} parent=19 // pred_check_branch
            %146 = sbr.rel (0) target = $region24
          $region23: #{ote_score.1} parent=19 // pred_region
            // Predicated region
            $region25: #{ote_score.1} parent=23 // pred_check
              _
            $region26: #{ote_score.1} parent=23 // pred_check_branch
              %148 = sbr.rel (0) target = $region28
            $region27: #{ote_score.1} parent=23 // pred_region
              loop: start=0, step=1, limit=1
              $region29: #{ote_score.1} parent=27 // loop_pre_header
                _
              $region30: #{ote_score.1} parent=27 // loop_header
                %s150 = sphi 0, %s154
                %p151 = scmp.ge.s32.totalorder %s150, 1
                %s155 = sphi %s144, %s144
                %s156 = sphi %s141, %s141
              $region31: #{ote_score.1} parent=27 // loop_header_branch
                %153 = sbr.rel (%p151) target = $region35
              $region32: #{ote_score.1} parent=27 // loop_body
                %v157 = vld [vmem:[%s155] sm:$0xff]
                %158 = vst [vmem:[%s156] sm:$0xff] %v157
                %v159 = vld [vmem:[%s155 + $0x8] sm:$0xff]
                %160 = vst [vmem:[%s156 + $0x8] sm:$0xff] %v159
                %v161 = vld [vmem:[%s155 + $0x10] sm:$0xff]
                %162 = vst [vmem:[%s156 + $0x10] sm:$0xff] %v161
                %v163 = vld [vmem:[%s155 + $0x18] sm:$0xff]
                %164 = vst [vmem:[%s156 + $0x18] sm:$0xff] %v163
                %v165 = vld [vmem:[%s155 + $0x40] sm:$0xff]
                %166 = vst [vmem:[%s156 + $0x20] sm:$0xff] %v165
                %v167 = vld [vmem:[%s155 + $0x48] sm:$0xff]
                %168 = vst [vmem:[%s156 + $0x28] sm:$0xff] %v167
                %v169 = vld [vmem:[%s155 + $0x50] sm:$0xff]
                %170 = vst [vmem:[%s156 + $0x30] sm:$0xff] %v169
                %v171 = vld [vmem:[%s155 + $0x58] sm:$0xff]
                %172 = vst [vmem:[%s156 + $0x38] sm:$0xff] %v171
                %v173 = vld [vmem:[%s155 + $0x80] sm:$0xff]
                %174 = vst [vmem:[%s156 + $0x40] sm:$0xff] %v173
                %v175 = vld [vmem:[%s155 + $0x88] sm:$0xff]
                %176 = vst [vmem:[%s156 + $0x48] sm:$0xff] %v175
                %v177 = vld [vmem:[%s155 + $0x90] sm:$0xff]
                %178 = vst [vmem:[%s156 + $0x50] sm:$0xff] %v177
                %v179 = vld [vmem:[%s155 + $0x98] sm:$0xff]
                %180 = vst [vmem:[%s156 + $0x58] sm:$0xff] %v179
                %v181 = vld [vmem:[%s155 + $0xc0] sm:$0xff]
                %182 = vst [vmem:[%s156 + $0x60] sm:$0xff] %v181
                %v183 = vld [vmem:[%s155 + $0xc8] sm:$0xff]
                %184 = vst [vmem:[%s156 + $0x68] sm:$0xff] %v183
                %v185 = vld [vmem:[%s155 + $0xd0] sm:$0xff]
                %186 = vst [vmem:[%s156 + $0x70] sm:$0xff] %v185
                %v187 = vld [vmem:[%s155 + $0xd8] sm:$0xff]
                %188 = vst [vmem:[%s156 + $0x78] sm:$0xff] %v187
              $region33: #{ote_score.1} parent=27 // loop_footer
                %s154 = sadd.s32 1, %s150
              $region34: #{ote_score.1} parent=27 // loop_footer_branch
                %149 = sbr.rel target = $region30
              $region35: #{ote_score.1} parent=27 // loop_exit
                _
            $region28: #{ote_score.1} parent=23 // pred_fallthru
              _
            // Predicated region
            $region36: #{ote_score.1} parent=23 // pred_check
              _
            $region37: #{ote_score.1} parent=23 // pred_check_branch
              %190 = sbr.rel target = $region39
            $region38: #{ote_score.1} parent=23 // pred_region
              _
            $region39: #{ote_score.1} parent=23 // pred_fallthru
              _
          $region24: #{ote_score.1} parent=19 // pred_fallthru
            _
          %191 = vnop
        $region20: #{ote_score.1} parent=15 // pred_fallthru
          _
        // Predicated region
        $region40: #{ote_score.1} parent=15 // pred_check
          %p192 = pneg %p58
        $region41: #{ote_score.1} parent=15 // pred_check_branch
          %194 = sbr.rel (%p192) target = $region43
        $region42: #{ote_score.1} parent=15 // pred_region
          %s195 = sand.u32 %s48, 1
          %s196 = sand.u32 %s48, 1
          %s197 = smul.addr %s196, 128
          %s198 = scalar_lea.vmem [#allocation3], %s197
          %s199 = smul.u32 4, %s12
          %s200 = smul.addr %s199, 8
          %s201 = scalar_lea.vmem %s1, %s200
          // Predicated region
          $region44: #{ote_score.1} parent=42 // pred_check
            _
          $region45: #{ote_score.1} parent=42 // pred_check_branch
            %203 = sbr.rel (0) target = $region47
          $region46: #{ote_score.1} parent=42 // pred_region
            // Predicated region
            $region48: #{ote_score.1} parent=46 // pred_check
              _
            $region49: #{ote_score.1} parent=46 // pred_check_branch
              %205 = sbr.rel (0) target = $region51
            $region50: #{ote_score.1} parent=46 // pred_region
              loop: start=0, step=1, limit=1
              $region52: #{ote_score.1} parent=50 // loop_pre_header
                _
              $region53: #{ote_score.1} parent=50 // loop_header
                %s207 = sphi 0, %s211
                %p208 = scmp.ge.s32.totalorder %s207, 1
                %s212 = sphi %s201, %s201
                %s213 = sphi %s198, %s198
              $region54: #{ote_score.1} parent=50 // loop_header_branch
                %210 = sbr.rel (%p208) target = $region58
              $region55: #{ote_score.1} parent=50 // loop_body
                %v214 = vld [vmem:[%s212] sm:$0xff]
                %215 = vst [vmem:[%s213] sm:$0xff] %v214
                %v216 = vld [vmem:[%s212 + $0x8] sm:$0xff]
                %217 = vst [vmem:[%s213 + $0x8] sm:$0xff] %v216
                %v218 = vld [vmem:[%s212 + $0x10] sm:$0xff]
                %219 = vst [vmem:[%s213 + $0x10] sm:$0xff] %v218
                %v220 = vld [vmem:[%s212 + $0x18] sm:$0xff]
                %221 = vst [vmem:[%s213 + $0x18] sm:$0xff] %v220
                %v222 = vld [vmem:[%s212 + $0x40] sm:$0xff]
                %223 = vst [vmem:[%s213 + $0x20] sm:$0xff] %v222
                %v224 = vld [vmem:[%s212 + $0x48] sm:$0xff]
                %225 = vst [vmem:[%s213 + $0x28] sm:$0xff] %v224
                %v226 = vld [vmem:[%s212 + $0x50] sm:$0xff]
                %227 = vst [vmem:[%s213 + $0x30] sm:$0xff] %v226
                %v228 = vld [vmem:[%s212 + $0x58] sm:$0xff]
                %229 = vst [vmem:[%s213 + $0x38] sm:$0xff] %v228
                %v230 = vld [vmem:[%s212 + $0x80] sm:$0xff]
                %231 = vst [vmem:[%s213 + $0x40] sm:$0xff] %v230
                %v232 = vld [vmem:[%s212 + $0x88] sm:$0xff]
                %233 = vst [vmem:[%s213 + $0x48] sm:$0xff] %v232
                %v234 = vld [vmem:[%s212 + $0x90] sm:$0xff]
                %235 = vst [vmem:[%s213 + $0x50] sm:$0xff] %v234
                %v236 = vld [vmem:[%s212 + $0x98] sm:$0xff]
                %237 = vst [vmem:[%s213 + $0x58] sm:$0xff] %v236
                %v238 = vld [vmem:[%s212 + $0xc0] sm:$0xff]
                %239 = vst [vmem:[%s213 + $0x60] sm:$0xff] %v238
                %v240 = vld [vmem:[%s212 + $0xc8] sm:$0xff]
                %241 = vst [vmem:[%s213 + $0x68] sm:$0xff] %v240
                %v242 = vld [vmem:[%s212 + $0xd0] sm:$0xff]
                %243 = vst [vmem:[%s213 + $0x70] sm:$0xff] %v242
                %v244 = vld [vmem:[%s212 + $0xd8] sm:$0xff]
                %245 = vst [vmem:[%s213 + $0x78] sm:$0xff] %v244
              $region56: #{ote_score.1} parent=50 // loop_footer
                %s211 = sadd.s32 1, %s207
              $region57: #{ote_score.1} parent=50 // loop_footer_branch
                %206 = sbr.rel target = $region53
              $region58: #{ote_score.1} parent=50 // loop_exit
                _
            $region51: #{ote_score.1} parent=46 // pred_fallthru
              _
            // Predicated region
            $region59: #{ote_score.1} parent=46 // pred_check
              _
            $region60: #{ote_score.1} parent=46 // pred_check_branch
              %247 = sbr.rel target = $region62
            $region61: #{ote_score.1} parent=46 // pred_region
              _
            $region62: #{ote_score.1} parent=46 // pred_fallthru
              _
          $region47: #{ote_score.1} parent=42 // pred_fallthru
            _
          %248 = vnop
        $region43: #{ote_score.1} parent=15 // pred_fallthru
          _
        // Predicated region
        $region63: #{ote_score.1} parent=15 // pred_check
          %p249 = pneg %p84
        $region64: #{ote_score.1} parent=15 // pred_check_branch
          %251 = sbr.rel (%p249) target = $region66
        $region65: #{ote_score.1} parent=15 // pred_region
          %s252 = sand.u32 %s74, 1
          %s253 = sand.u32 %s74, 1
          %s254 = smul.addr %s253, 512
          %s255 = scalar_lea.vmem [#allocation4], %s254
          %s256 = smul.u32 4, %s12
          %s257 = smul.addr %s256, 8
          %s258 = scalar_lea.vmem %s2, %s257
          // Predicated region
          $region67: #{ote_score.1} parent=65 // pred_check
            _
          $region68: #{ote_score.1} parent=65 // pred_check_branch
            %260 = sbr.rel (0) target = $region70
          $region69: #{ote_score.1} parent=65 // pred_region
            // Predicated region
            $region71: #{ote_score.1} parent=69 // pred_check
              _
            $region72: #{ote_score.1} parent=69 // pred_check_branch
              %262 = sbr.rel (0) target = $region74
            $region73: #{ote_score.1} parent=69 // pred_region
              loop: start=0, step=1, limit=1
              $region75: #{ote_score.1} parent=73 // loop_pre_header
                _
              $region76: #{ote_score.1} parent=73 // loop_header
                %s264 = sphi 0, %s268
                %p265 = scmp.ge.s32.totalorder %s264, 1
                %s269 = sphi %s258, %s258
                %s270 = sphi %s255, %s255
              $region77: #{ote_score.1} parent=73 // loop_header_branch
                %267 = sbr.rel (%p265) target = $region81
              $region78: #{ote_score.1} parent=73 // loop_body
                %v271 = vld [vmem:[%s269] sm:$0xff]
                %272 = vst [vmem:[%s270] sm:$0xff] %v271
                %v273 = vld [vmem:[%s269 + $0x8] sm:$0xff]
                %274 = vst [vmem:[%s270 + $0x8] sm:$0xff] %v273
                %v275 = vld [vmem:[%s269 + $0x10] sm:$0xff]
                %276 = vst [vmem:[%s270 + $0x10] sm:$0xff] %v275
                %v277 = vld [vmem:[%s269 + $0x18] sm:$0xff]
                %278 = vst [vmem:[%s270 + $0x18] sm:$0xff] %v277
                %v279 = vld [vmem:[%s269 + $0x40] sm:$0xff]
                %280 = vst [vmem:[%s270 + $0x20] sm:$0xff] %v279
                %v281 = vld [vmem:[%s269 + $0x48] sm:$0xff]
                %282 = vst [vmem:[%s270 + $0x28] sm:$0xff] %v281
                %v283 = vld [vmem:[%s269 + $0x50] sm:$0xff]
                %284 = vst [vmem:[%s270 + $0x30] sm:$0xff] %v283
                %v285 = vld [vmem:[%s269 + $0x58] sm:$0xff]
                %286 = vst [vmem:[%s270 + $0x38] sm:$0xff] %v285
                %v287 = vld [vmem:[%s269 + $0x80] sm:$0xff]
                %288 = vst [vmem:[%s270 + $0x40] sm:$0xff] %v287
                %v289 = vld [vmem:[%s269 + $0x88] sm:$0xff]
                %290 = vst [vmem:[%s270 + $0x48] sm:$0xff] %v289
                %v291 = vld [vmem:[%s269 + $0x90] sm:$0xff]
                %292 = vst [vmem:[%s270 + $0x50] sm:$0xff] %v291
                %v293 = vld [vmem:[%s269 + $0x98] sm:$0xff]
                %294 = vst [vmem:[%s270 + $0x58] sm:$0xff] %v293
                %v295 = vld [vmem:[%s269 + $0xc0] sm:$0xff]
                %296 = vst [vmem:[%s270 + $0x60] sm:$0xff] %v295
                %v297 = vld [vmem:[%s269 + $0xc8] sm:$0xff]
                %298 = vst [vmem:[%s270 + $0x68] sm:$0xff] %v297
                %v299 = vld [vmem:[%s269 + $0xd0] sm:$0xff]
                %300 = vst [vmem:[%s270 + $0x70] sm:$0xff] %v299
                %v301 = vld [vmem:[%s269 + $0xd8] sm:$0xff]
                %302 = vst [vmem:[%s270 + $0x78] sm:$0xff] %v301
                %v303 = vld [vmem:[%s269 + $0x100] sm:$0xff]
                %304 = vst [vmem:[%s270 + $0x80] sm:$0xff] %v303
                %v305 = vld [vmem:[%s269 + $0x108] sm:$0xff]
                %306 = vst [vmem:[%s270 + $0x88] sm:$0xff] %v305
                %v307 = vld [vmem:[%s269 + $0x110] sm:$0xff]
                %308 = vst [vmem:[%s270 + $0x90] sm:$0xff] %v307
                %v309 = vld [vmem:[%s269 + $0x118] sm:$0xff]
                %310 = vst [vmem:[%s270 + $0x98] sm:$0xff] %v309
                %v311 = vld [vmem:[%s269 + $0x140] sm:$0xff]
                %312 = vst [vmem:[%s270 + $0xa0] sm:$0xff] %v311
                %v313 = vld [vmem:[%s269 + $0x148] sm:$0xff]
                %314 = vst [vmem:[%s270 + $0xa8] sm:$0xff] %v313
                %v315 = vld [vmem:[%s269 + $0x150] sm:$0xff]
                %316 = vst [vmem:[%s270 + $0xb0] sm:$0xff] %v315
                %v317 = vld [vmem:[%s269 + $0x158] sm:$0xff]
                %318 = vst [vmem:[%s270 + $0xb8] sm:$0xff] %v317
                %v319 = vld [vmem:[%s269 + $0x180] sm:$0xff]
                %320 = vst [vmem:[%s270 + $0xc0] sm:$0xff] %v319
                %v321 = vld [vmem:[%s269 + $0x188] sm:$0xff]
                %322 = vst [vmem:[%s270 + $0xc8] sm:$0xff] %v321
                %v323 = vld [vmem:[%s269 + $0x190] sm:$0xff]
                %324 = vst [vmem:[%s270 + $0xd0] sm:$0xff] %v323
                %v325 = vld [vmem:[%s269 + $0x198] sm:$0xff]
                %326 = vst [vmem:[%s270 + $0xd8] sm:$0xff] %v325
                %v327 = vld [vmem:[%s269 + $0x1c0] sm:$0xff]
                %328 = vst [vmem:[%s270 + $0xe0] sm:$0xff] %v327
                %v329 = vld [vmem:[%s269 + $0x1c8] sm:$0xff]
                %330 = vst [vmem:[%s270 + $0xe8] sm:$0xff] %v329
                %v331 = vld [vmem:[%s269 + $0x1d0] sm:$0xff]
                %332 = vst [vmem:[%s270 + $0xf0] sm:$0xff] %v331
                %v333 = vld [vmem:[%s269 + $0x1d8] sm:$0xff]
                %334 = vst [vmem:[%s270 + $0xf8] sm:$0xff] %v333
                %v335 = vld [vmem:[%s269 + $0x200] sm:$0xff]
                %336 = vst [vmem:[%s270 + $0x100] sm:$0xff] %v335
                %v337 = vld [vmem:[%s269 + $0x208] sm:$0xff]
                %338 = vst [vmem:[%s270 + $0x108] sm:$0xff] %v337
                %v339 = vld [vmem:[%s269 + $0x210] sm:$0xff]
                %340 = vst [vmem:[%s270 + $0x110] sm:$0xff] %v339
                %v341 = vld [vmem:[%s269 + $0x218] sm:$0xff]
                %342 = vst [vmem:[%s270 + $0x118] sm:$0xff] %v341
                %v343 = vld [vmem:[%s269 + $0x240] sm:$0xff]
                %344 = vst [vmem:[%s270 + $0x120] sm:$0xff] %v343
                %v345 = vld [vmem:[%s269 + $0x248] sm:$0xff]
                %346 = vst [vmem:[%s270 + $0x128] sm:$0xff] %v345
                %v347 = vld [vmem:[%s269 + $0x250] sm:$0xff]
                %348 = vst [vmem:[%s270 + $0x130] sm:$0xff] %v347
                %v349 = vld [vmem:[%s269 + $0x258] sm:$0xff]
                %350 = vst [vmem:[%s270 + $0x138] sm:$0xff] %v349
                %v351 = vld [vmem:[%s269 + $0x280] sm:$0xff]
                %352 = vst [vmem:[%s270 + $0x140] sm:$0xff] %v351
                %v353 = vld [vmem:[%s269 + $0x288] sm:$0xff]
                %354 = vst [vmem:[%s270 + $0x148] sm:$0xff] %v353
                %v355 = vld [vmem:[%s269 + $0x290] sm:$0xff]
                %356 = vst [vmem:[%s270 + $0x150] sm:$0xff] %v355
                %v357 = vld [vmem:[%s269 + $0x298] sm:$0xff]
                %358 = vst [vmem:[%s270 + $0x158] sm:$0xff] %v357
                %v359 = vld [vmem:[%s269 + $0x2c0] sm:$0xff]
                %360 = vst [vmem:[%s270 + $0x160] sm:$0xff] %v359
                %v361 = vld [vmem:[%s269 + $0x2c8] sm:$0xff]
                %362 = vst [vmem:[%s270 + $0x168] sm:$0xff] %v361
                %v363 = vld [vmem:[%s269 + $0x2d0] sm:$0xff]
                %364 = vst [vmem:[%s270 + $0x170] sm:$0xff] %v363
                %v365 = vld [vmem:[%s269 + $0x2d8] sm:$0xff]
                %366 = vst [vmem:[%s270 + $0x178] sm:$0xff] %v365
                %v367 = vld [vmem:[%s269 + $0x300] sm:$0xff]
                %368 = vst [vmem:[%s270 + $0x180] sm:$0xff] %v367
                %v369 = vld [vmem:[%s269 + $0x308] sm:$0xff]
                %370 = vst [vmem:[%s270 + $0x188] sm:$0xff] %v369
                %v371 = vld [vmem:[%s269 + $0x310] sm:$0xff]
                %372 = vst [vmem:[%s270 + $0x190] sm:$0xff] %v371
                %v373 = vld [vmem:[%s269 + $0x318] sm:$0xff]
                %374 = vst [vmem:[%s270 + $0x198] sm:$0xff] %v373
                %v375 = vld [vmem:[%s269 + $0x340] sm:$0xff]
                %376 = vst [vmem:[%s270 + $0x1a0] sm:$0xff] %v375
                %v377 = vld [vmem:[%s269 + $0x348] sm:$0xff]
                %378 = vst [vmem:[%s270 + $0x1a8] sm:$0xff] %v377
                %v379 = vld [vmem:[%s269 + $0x350] sm:$0xff]
                %380 = vst [vmem:[%s270 + $0x1b0] sm:$0xff] %v379
                %v381 = vld [vmem:[%s269 + $0x358] sm:$0xff]
                %382 = vst [vmem:[%s270 + $0x1b8] sm:$0xff] %v381
                %v383 = vld [vmem:[%s269 + $0x380] sm:$0xff]
                %384 = vst [vmem:[%s270 + $0x1c0] sm:$0xff] %v383
                %v385 = vld [vmem:[%s269 + $0x388] sm:$0xff]
                %386 = vst [vmem:[%s270 + $0x1c8] sm:$0xff] %v385
                %v387 = vld [vmem:[%s269 + $0x390] sm:$0xff]
                %388 = vst [vmem:[%s270 + $0x1d0] sm:$0xff] %v387
                %v389 = vld [vmem:[%s269 + $0x398] sm:$0xff]
                %390 = vst [vmem:[%s270 + $0x1d8] sm:$0xff] %v389
                %v391 = vld [vmem:[%s269 + $0x3c0] sm:$0xff]
                %392 = vst [vmem:[%s270 + $0x1e0] sm:$0xff] %v391
                %v393 = vld [vmem:[%s269 + $0x3c8] sm:$0xff]
                %394 = vst [vmem:[%s270 + $0x1e8] sm:$0xff] %v393
                %v395 = vld [vmem:[%s269 + $0x3d0] sm:$0xff]
                %396 = vst [vmem:[%s270 + $0x1f0] sm:$0xff] %v395
                %v397 = vld [vmem:[%s269 + $0x3d8] sm:$0xff]
                %398 = vst [vmem:[%s270 + $0x1f8] sm:$0xff] %v397
              $region79: #{ote_score.1} parent=73 // loop_footer
                %s268 = sadd.s32 1, %s264
              $region80: #{ote_score.1} parent=73 // loop_footer_branch
                %263 = sbr.rel target = $region76
              $region81: #{ote_score.1} parent=73 // loop_exit
                _
            $region74: #{ote_score.1} parent=69 // pred_fallthru
              _
            // Predicated region
            $region82: #{ote_score.1} parent=69 // pred_check
              _
            $region83: #{ote_score.1} parent=69 // pred_check_branch
              %400 = sbr.rel target = $region85
            $region84: #{ote_score.1} parent=69 // pred_region
              _
            $region85: #{ote_score.1} parent=69 // pred_fallthru
              _
          $region70: #{ote_score.1} parent=65 // pred_fallthru
            _
          %401 = vnop
        $region66: #{ote_score.1} parent=15 // pred_fallthru
          _
      $region16: #{ote_score.1} parent=5 // pred_fallthru
        _
      %p402 = scmp.le.s32.totalorder 1, %s12
      %p403 = scmp.lt.s32.totalorder %s12, 3
      %p404 = pnand %p402, %p403
      %p405 = pneg %p404
      // Predicated region
      $region86: #{ote_score.1} parent=5 // pred_check
        _
      $region87: #{ote_score.1} parent=5 // pred_check_branch
        %407 = sbr.rel (%p404) target = $region89
      $region88: #{ote_score.1} parent=5 // pred_region
        %s408 = ssub.s32 %s12, 1
        %s409 = sand.u32 %s25, 1
        %s410 = sand.u32 %s25, 1
        %s411 = smul.addr %s410, 128
        %s412 = scalar_lea.vmem [#allocation2], %s411
        // Predicated region
        $region90: #{ote_score.1} parent=88 // pred_check
          %p413 = pneg %p38
        $region91: #{ote_score.1} parent=88 // pred_check_branch
          %415 = sbr.rel (%p413) target = $region93
        $region92: #{ote_score.1} parent=88 // pred_region
          _
        $region93: #{ote_score.1} parent=88 // pred_fallthru
          _
        %s416 = sand.u32 %s51, 1
        %s417 = sand.u32 %s51, 1
        %s418 = smul.addr %s417, 128
        %s419 = scalar_lea.vmem [#allocation3], %s418
        // Predicated region
        $region94: #{ote_score.1} parent=88 // pred_check
          %p420 = pneg %p64
        $region95: #{ote_score.1} parent=88 // pred_check_branch
          %422 = sbr.rel (%p420) target = $region97
        $region96: #{ote_score.1} parent=88 // pred_region
          _
        $region97: #{ote_score.1} parent=88 // pred_fallthru
          _
        %s423 = sand.u32 %s77, 1
        %s424 = sand.u32 %s77, 1
        %s425 = smul.addr %s424, 512
        %s426 = scalar_lea.vmem [#allocation4], %s425
        // Predicated region
        $region98: #{ote_score.1} parent=88 // pred_check
          %p427 = pneg %p90
        $region99: #{ote_score.1} parent=88 // pred_check_branch
          %429 = sbr.rel (%p427) target = $region101
        $region100: #{ote_score.1} parent=88 // pred_region
          _
        $region101: #{ote_score.1} parent=88 // pred_fallthru
          _
        %s430 = sand.u32 %s25, 1
        %s431 = sand.u32 %s25, 1
        %s432 = smul.addr %s431, 128
        %s433 = scalar_lea.vmem [#allocation2], %s432
        %p434 = pneg %p38
        %p435 = pneg %p35
        %s436 = sand.u32 %s51, 1
        %s437 = sand.u32 %s51, 1
        %s438 = smul.addr %s437, 128
        %s439 = scalar_lea.vmem [#allocation3], %s438
        %p440 = pneg %p64
        %p441 = pneg %p61
        %s442 = sand.u32 %s77, 1
        %s443 = sand.u32 %s77, 1
        %s444 = smul.addr %s443, 512
        %s445 = scalar_lea.vmem [#allocation4], %s444
        %p446 = pneg %p90
        %p447 = pneg %p87
        %p448 = pneg %p116
        %p449 = pneg %p113
        %s450 = sand.u32 %s103, 1
        %s451 = scalar_lea.sflag [#allocation6], %s450
        %s452 = sand.u32 %s103, 1
        %s453 = smul.addr %s452, 4
        %s454 = scalar_lea.vmem [#allocation5], %s453
        %s455 = smul.u32 4, %s17
        %s456 = smul.u32 4, %s17
        %s457 = smul.u32 4, %s17
        %s458 = smul.u32 4, %s17
        %v459 = vld [vmem:[%s412] sm:$0xff]
        %v460 = vld [vmem:[%s412 + $0x8] sm:$0xff]
        %v461 = vld [vmem:[%s412 + $0x10] sm:$0xff]
        %v462 = vld [vmem:[%s412 + $0x18] sm:$0xff]
        %s463 = scalar_lea.vmem %s412, 32 [#allocation2]
        %v464 = vld [vmem:[%s463] sm:$0xff]
        %v465 = vld [vmem:[%s463 + $0x8] sm:$0xff]
        %v466 = vld [vmem:[%s463 + $0x10] sm:$0xff]
        %v467 = vld [vmem:[%s463 + $0x18] sm:$0xff]
        %s468 = scalar_lea.vmem %s412, 64 [#allocation2]
        %v469 = vld [vmem:[%s468] sm:$0xff]
        %v470 = vld [vmem:[%s468 + $0x8] sm:$0xff]
        %v471 = vld [vmem:[%s468 + $0x10] sm:$0xff]
        %v472 = vld [vmem:[%s468 + $0x18] sm:$0xff]
        %s473 = scalar_lea.vmem %s412, 96 [#allocation2]
        %v474 = vld [vmem:[%s473] sm:$0xff]
        %v475 = vld [vmem:[%s473 + $0x8] sm:$0xff]
        %v476 = vld [vmem:[%s473 + $0x10] sm:$0xff]
        %v477 = vld [vmem:[%s473 + $0x18] sm:$0xff]
        %v478 = vld [vmem:[%s426] sm:$0xff]
        %v479 = vld [vmem:[%s426 + $0x8] sm:$0xff]
        %v480 = vld [vmem:[%s426 + $0x10] sm:$0xff]
        %v481 = vld [vmem:[%s426 + $0x18] sm:$0xff]
        %v482 = vmul.f32 %v459, %v478
        %v483 = vmul.f32 %v460, %v479
        %v484 = vmul.f32 %v461, %v480
        %v485 = vmul.f32 %v462, %v481
        %s486 = scalar_lea.vmem %s426, 128 [#allocation4]
        %v487 = vld [vmem:[%s486] sm:$0xff]
        %v488 = vld [vmem:[%s486 + $0x8] sm:$0xff]
        %v489 = vld [vmem:[%s486 + $0x10] sm:$0xff]
        %v490 = vld [vmem:[%s486 + $0x18] sm:$0xff]
        %v491 = vmul.f32 %v464, %v487
        %v492 = vmul.f32 %v465, %v488
        %v493 = vmul.f32 %v466, %v489
        %v494 = vmul.f32 %v467, %v490
        %v495 = vadd.f32 %v482, %v491
        %v496 = vadd.f32 %v483, %v492
        %v497 = vadd.f32 %v484, %v493
        %v498 = vadd.f32 %v485, %v494
        %s499 = scalar_lea.vmem %s426, 256 [#allocation4]
        %v500 = vld [vmem:[%s499] sm:$0xff]
        %v501 = vld [vmem:[%s499 + $0x8] sm:$0xff]
        %v502 = vld [vmem:[%s499 + $0x10] sm:$0xff]
        %v503 = vld [vmem:[%s499 + $0x18] sm:$0xff]
        %v504 = vmul.f32 %v469, %v500
        %v505 = vmul.f32 %v470, %v501
        %v506 = vmul.f32 %v471, %v502
        %v507 = vmul.f32 %v472, %v503
        %v508 = vadd.f32 %v495, %v504
        %v509 = vadd.f32 %v496, %v505
        %v510 = vadd.f32 %v497, %v506
        %v511 = vadd.f32 %v498, %v507
        %s512 = scalar_lea.vmem %s426, 384 [#allocation4]
        %v513 = vld [vmem:[%s512] sm:$0xff]
        %v514 = vld [vmem:[%s512 + $0x8] sm:$0xff]
        %v515 = vld [vmem:[%s512 + $0x10] sm:$0xff]
        %v516 = vld [vmem:[%s512 + $0x18] sm:$0xff]
        %v517 = vmul.f32 %v474, %v513
        %v518 = vmul.f32 %v475, %v514
        %v519 = vmul.f32 %v476, %v515
        %v520 = vmul.f32 %v477, %v516
        %v521 = vadd.f32 %v508, %v517
        %v522 = vadd.f32 %v509, %v518
        %v523 = vadd.f32 %v510, %v519
        %v524 = vadd.f32 %v511, %v520
        %v525 = vld [vmem:[%s419] sm:$0xff]
        %v526 = vld [vmem:[%s419 + $0x8] sm:$0xff]
        %v527 = vld [vmem:[%s419 + $0x10] sm:$0xff]
        %v528 = vld [vmem:[%s419 + $0x18] sm:$0xff]
        %v529 = vsub.f32 %v521, %v525
        %v530 = vsub.f32 %v522, %v526
        %v531 = vsub.f32 %v523, %v527
        %v532 = vsub.f32 %v524, %v528
        %v533 = vmul.f32 %v529, %v529
        %v534 = vmul.f32 %v530, %v530
        %v535 = vmul.f32 %v531, %v531
        %v536 = vmul.f32 %v532, %v532
        %s537 = scalar_lea.vmem %s426, 32 [#allocation4]
        %v538 = vld [vmem:[%s537] sm:$0xff]
        %v539 = vld [vmem:[%s537 + $0x8] sm:$0xff]
        %v540 = vld [vmem:[%s537 + $0x10] sm:$0xff]
        %v541 = vld [vmem:[%s537 + $0x18] sm:$0xff]
        %v542 = vmul.f32 %v459, %v538
        %v543 = vmul.f32 %v460, %v539
        %v544 = vmul.f32 %v461, %v540
        %v545 = vmul.f32 %v462, %v541
        %s546 = scalar_lea.vmem %s426, 160 [#allocation4]
        %v547 = vld [vmem:[%s546] sm:$0xff]
        %v548 = vld [vmem:[%s546 + $0x8] sm:$0xff]
        %v549 = vld [vmem:[%s546 + $0x10] sm:$0xff]
        %v550 = vld [vmem:[%s546 + $0x18] sm:$0xff]
        %v551 = vmul.f32 %v464, %v547
        %v552 = vmul.f32 %v465, %v548
        %v553 = vmul.f32 %v466, %v549
        %v554 = vmul.f32 %v467, %v550
        %v555 = vadd.f32 %v542, %v551
        %v556 = vadd.f32 %v543, %v552
        %v557 = vadd.f32 %v544, %v553
        %v558 = vadd.f32 %v545, %v554
        %s559 = scalar_lea.vmem %s426, 288 [#allocation4]
        %v560 = vld [vmem:[%s559] sm:$0xff]
        %v561 = vld [vmem:[%s559 + $0x8] sm:$0xff]
        %v562 = vld [vmem:[%s559 + $0x10] sm:$0xff]
        %v563 = vld [vmem:[%s559 + $0x18] sm:$0xff]
        %v564 = vmul.f32 %v469, %v560
        %v565 = vmul.f32 %v470, %v561
        %v566 = vmul.f32 %v471, %v562
        %v567 = vmul.f32 %v472, %v563
        %v568 = vadd.f32 %v555, %v564
        %v569 = vadd.f32 %v556, %v565
        %v570 = vadd.f32 %v557, %v566
        %v571 = vadd.f32 %v558, %v567
        %s572 = scalar_lea.vmem %s426, 416 [#allocation4]
        %v573 = vld [vmem:[%s572] sm:$0xff]
        %v574 = vld [vmem:[%s572 + $0x8] sm:$0xff]
        %v575 = vld [vmem:[%s572 + $0x10] sm:$0xff]
        %v576 = vld [vmem:[%s572 + $0x18] sm:$0xff]
        %v577 = vmul.f32 %v474, %v573
        %v578 = vmul.f32 %v475, %v574
        %v579 = vmul.f32 %v476, %v575
        %v580 = vmul.f32 %v477, %v576
        %v581 = vadd.f32 %v568, %v577
        %v582 = vadd.f32 %v569, %v578
        %v583 = vadd.f32 %v570, %v579
        %v584 = vadd.f32 %v571, %v580
        %s585 = scalar_lea.vmem %s419, 32 [#allocation3]
        %v586 = vld [vmem:[%s585] sm:$0xff]
        %v587 = vld [vmem:[%s585 + $0x8] sm:$0xff]
        %v588 = vld [vmem:[%s585 + $0x10] sm:$0xff]
        %v589 = vld [vmem:[%s585 + $0x18] sm:$0xff]
        %v590 = vsub.f32 %v581, %v586
        %v591 = vsub.f32 %v582, %v587
        %v592 = vsub.f32 %v583, %v588
        %v593 = vsub.f32 %v584, %v589
        %v594 = vmul.f32 %v590, %v590
        %v595 = vmul.f32 %v591, %v591
        %v596 = vmul.f32 %v592, %v592
        %v597 = vmul.f32 %v593, %v593
        %v598 = vadd.f32 %v533, %v594
        %v599 = vadd.f32 %v534, %v595
        %v600 = vadd.f32 %v535, %v596
        %v601 = vadd.f32 %v536, %v597
        %s602 = scalar_lea.vmem %s426, 64 [#allocation4]
        %v603 = vld [vmem:[%s602] sm:$0xff]
        %v604 = vld [vmem:[%s602 + $0x8] sm:$0xff]
        %v605 = vld [vmem:[%s602 + $0x10] sm:$0xff]
        %v606 = vld [vmem:[%s602 + $0x18] sm:$0xff]
        %v607 = vmul.f32 %v459, %v603
        %v608 = vmul.f32 %v460, %v604
        %v609 = vmul.f32 %v461, %v605
        %v610 = vmul.f32 %v462, %v606
        %s611 = scalar_lea.vmem %s426, 192 [#allocation4]
        %v612 = vld [vmem:[%s611] sm:$0xff]
        %v613 = vld [vmem:[%s611 + $0x8] sm:$0xff]
        %v614 = vld [vmem:[%s611 + $0x10] sm:$0xff]
        %v615 = vld [vmem:[%s611 + $0x18] sm:$0xff]
        %v616 = vmul.f32 %v464, %v612
        %v617 = vmul.f32 %v465, %v613
        %v618 = vmul.f32 %v466, %v614
        %v619 = vmul.f32 %v467, %v615
        %v620 = vadd.f32 %v607, %v616
        %v621 = vadd.f32 %v608, %v617
        %v622 = vadd.f32 %v609, %v618
        %v623 = vadd.f32 %v610, %v619
        %s624 = scalar_lea.vmem %s426, 320 [#allocation4]
        %v625 = vld [vmem:[%s624] sm:$0xff]
        %v626 = vld [vmem:[%s624 + $0x8] sm:$0xff]
        %v627 = vld [vmem:[%s624 + $0x10] sm:$0xff]
        %v628 = vld [vmem:[%s624 + $0x18] sm:$0xff]
        %v629 = vmul.f32 %v469, %v625
        %v630 = vmul.f32 %v470, %v626
        %v631 = vmul.f32 %v471, %v627
        %v632 = vmul.f32 %v472, %v628
        %v633 = vadd.f32 %v620, %v629
        %v634 = vadd.f32 %v621, %v630
        %v635 = vadd.f32 %v622, %v631
        %v636 = vadd.f32 %v623, %v632
        %s637 = scalar_lea.vmem %s426, 448 [#allocation4]
        %v638 = vld [vmem:[%s637] sm:$0xff]
        %v639 = vld [vmem:[%s637 + $0x8] sm:$0xff]
        %v640 = vld [vmem:[%s637 + $0x10] sm:$0xff]
        %v641 = vld [vmem:[%s637 + $0x18] sm:$0xff]
        %v642 = vmul.f32 %v474, %v638
        %v643 = vmul.f32 %v475, %v639
        %v644 = vmul.f32 %v476, %v640
        %v645 = vmul.f32 %v477, %v641
        %v646 = vadd.f32 %v633, %v642
        %v647 = vadd.f32 %v634, %v643
        %v648 = vadd.f32 %v635, %v644
        %v649 = vadd.f32 %v636, %v645
        %s650 = scalar_lea.vmem %s419, 64 [#allocation3]
        %v651 = vld [vmem:[%s650] sm:$0xff]
        %v652 = vld [vmem:[%s650 + $0x8] sm:$0xff]
        %v653 = vld [vmem:[%s650 + $0x10] sm:$0xff]
        %v654 = vld [vmem:[%s650 + $0x18] sm:$0xff]
        %v655 = vsub.f32 %v646, %v651
        %v656 = vsub.f32 %v647, %v652
        %v657 = vsub.f32 %v648, %v653
        %v658 = vsub.f32 %v649, %v654
        %v659 = vmul.f32 %v655, %v655
        %v660 = vmul.f32 %v656, %v656
        %v661 = vmul.f32 %v657, %v657
        %v662 = vmul.f32 %v658, %v658
        %v663 = vadd.f32 %v598, %v659
        %v664 = vadd.f32 %v599, %v660
        %v665 = vadd.f32 %v600, %v661
        %v666 = vadd.f32 %v601, %v662
        %s667 = scalar_lea.vmem %s426, 96 [#allocation4]
        %v668 = vld [vmem:[%s667] sm:$0xff]
        %v669 = vld [vmem:[%s667 + $0x8] sm:$0xff]
        %v670 = vld [vmem:[%s667 + $0x10] sm:$0xff]
        %v671 = vld [vmem:[%s667 + $0x18] sm:$0xff]
        %v672 = vmul.f32 %v459, %v668
        %v673 = vmul.f32 %v460, %v669
        %v674 = vmul.f32 %v461, %v670
        %v675 = vmul.f32 %v462, %v671
        %s676 = scalar_lea.vmem %s426, 224 [#allocation4]
        %v677 = vld [vmem:[%s676] sm:$0xff]
        %v678 = vld [vmem:[%s676 + $0x8] sm:$0xff]
        %v679 = vld [vmem:[%s676 + $0x10] sm:$0xff]
        %v680 = vld [vmem:[%s676 + $0x18] sm:$0xff]
        %v681 = vmul.f32 %v464, %v677
        %v682 = vmul.f32 %v465, %v678
        %v683 = vmul.f32 %v466, %v679
        %v684 = vmul.f32 %v467, %v680
        %v685 = vadd.f32 %v672, %v681
        %v686 = vadd.f32 %v673, %v682
        %v687 = vadd.f32 %v674, %v683
        %v688 = vadd.f32 %v675, %v684
        %s689 = scalar_lea.vmem %s426, 352 [#allocation4]
        %v690 = vld [vmem:[%s689] sm:$0xff]
        %v691 = vld [vmem:[%s689 + $0x8] sm:$0xff]
        %v692 = vld [vmem:[%s689 + $0x10] sm:$0xff]
        %v693 = vld [vmem:[%s689 + $0x18] sm:$0xff]
        %v694 = vmul.f32 %v469, %v690
        %v695 = vmul.f32 %v470, %v691
        %v696 = vmul.f32 %v471, %v692
        %v697 = vmul.f32 %v472, %v693
        %v698 = vadd.f32 %v685, %v694
        %v699 = vadd.f32 %v686, %v695
        %v700 = vadd.f32 %v687, %v696
        %v701 = vadd.f32 %v688, %v697
        %s702 = scalar_lea.vmem %s426, 480 [#allocation4]
        %v703 = vld [vmem:[%s702] sm:$0xff]
        %v704 = vld [vmem:[%s702 + $0x8] sm:$0xff]
        %v705 = vld [vmem:[%s702 + $0x10] sm:$0xff]
        %v706 = vld [vmem:[%s702 + $0x18] sm:$0xff]
        %v707 = vmul.f32 %v474, %v703
        %v708 = vmul.f32 %v475, %v704
        %v709 = vmul.f32 %v476, %v705
        %v710 = vmul.f32 %v477, %v706
        %v711 = vadd.f32 %v698, %v707
        %v712 = vadd.f32 %v699, %v708
        %v713 = vadd.f32 %v700, %v709
        %v714 = vadd.f32 %v701, %v710
        %s715 = scalar_lea.vmem %s419, 96 [#allocation3]
        %v716 = vld [vmem:[%s715] sm:$0xff]
        %v717 = vld [vmem:[%s715 + $0x8] sm:$0xff]
        %v718 = vld [vmem:[%s715 + $0x10] sm:$0xff]
        %v719 = vld [vmem:[%s715 + $0x18] sm:$0xff]
        %v720 = vsub.f32 %v711, %v716
        %v721 = vsub.f32 %v712, %v717
        %v722 = vsub.f32 %v713, %v718
        %v723 = vsub.f32 %v714, %v719
        %v724 = vmul.f32 %v720, %v720
        %v725 = vmul.f32 %v721, %v721
        %v726 = vmul.f32 %v722, %v722
        %v727 = vmul.f32 %v723, %v723
        %v728 = vadd.f32 %v663, %v724
        %v729 = vadd.f32 %v664, %v725
        %v730 = vadd.f32 %v665, %v726
        %v731 = vadd.f32 %v666, %v727
        %v732 = vrsqrt.pop %v728
        %v733 = vmul.f32 %v728, %v732
        %vm734 = vcmp.eq.f32.partialorder %v728, inf
        %v735 = vsel %vm734, %v728, %v733
        %vm736 = vcmp.eq.f32.partialorder %v728, 0.0
        %v737 = vand.u32 %v728, 2147483648
        %v738 = vsel %vm736, %v737, %v735
        %v739 = vrsqrt.pop %v729
        %v740 = vmul.f32 %v729, %v739
        %vm741 = vcmp.eq.f32.partialorder %v729, inf
        %v742 = vsel %vm741, %v729, %v740
        %vm743 = vcmp.eq.f32.partialorder %v729, 0.0
        %v744 = vand.u32 %v729, 2147483648
        %v745 = vsel %vm743, %v744, %v742
        %v746 = vrsqrt.pop %v730
        %v747 = vmul.f32 %v730, %v746
        %vm748 = vcmp.eq.f32.partialorder %v730, inf
        %v749 = vsel %vm748, %v730, %v747
        %vm750 = vcmp.eq.f32.partialorder %v730, 0.0
        %v751 = vand.u32 %v730, 2147483648
        %v752 = vsel %vm750, %v751, %v749
        %v753 = vrsqrt.pop %v731
        %v754 = vmul.f32 %v731, %v753
        %vm755 = vcmp.eq.f32.partialorder %v731, inf
        %v756 = vsel %vm755, %v731, %v754
        %vm757 = vcmp.eq.f32.partialorder %v731, 0.0
        %v758 = vand.u32 %v731, 2147483648
        %v759 = vsel %vm757, %v758, %v756
        %v760 = vrot.slane %v738, 4
        %v761 = vadd.f32 %v738, %v760
        %v762 = vrot.slane %v761, 2
        %v763 = vadd.f32 %v761, %v762
        %v764 = vrot.slane %v763, 1
        %v765 = vadd.f32 %v763, %v764
        %v766 = vrot.slane %v745, 4
        %v767 = vadd.f32 %v745, %v766
        %v768 = vrot.slane %v767, 2
        %v769 = vadd.f32 %v767, %v768
        %v770 = vrot.slane %v769, 1
        %v771 = vadd.f32 %v769, %v770
        %v772 = vrot.slane %v752, 4
        %v773 = vadd.f32 %v752, %v772
        %v774 = vrot.slane %v773, 2
        %v775 = vadd.f32 %v773, %v774
        %v776 = vrot.slane %v775, 1
        %v777 = vadd.f32 %v775, %v776
        %v778 = vrot.slane %v759, 4
        %v779 = vadd.f32 %v759, %v778
        %v780 = vrot.slane %v779, 2
        %v781 = vadd.f32 %v779, %v780
        %v782 = vrot.slane %v781, 1
        %v783 = vadd.f32 %v781, %v782
        %v784 = vsub.f32 12.0, %v765
        %v785 = vsub.f32 12.0, %v771
        %v786 = vsub.f32 12.0, %v777
        %v787 = vsub.f32 12.0, %v783
        %v792 = vcombine.low %v784, %v785
        %v793 = vcombine.low %v786, %v787
        %v795 = vunpack.c.l.s4 1966171168
        %v796 = vunpack.c.0.s8 %v795
        %v797 = vlaneseq
        %v798 = vshrl.u32 %v797, 7
        %v799 = vsub.s32 %v796, %v798
        %v800 = vrot.slane %v792, %v799
        %v802 = vunpack.c.l.s4 1966171168
        %v803 = vunpack.c.0.s8 %v802
        %v804 = vlaneseq
        %v805 = vshrl.u32 %v804, 7
        %v806 = vsub.s32 %v803, %v805
        %v807 = vrot.slane %v793, %v806
        %v808 = vcombine.low %v800, %v807
        %v810 = vunpack.c.l.s4 1966171168
        %v811 = vunpack.c.0.s8 %v810
        %v812 = vlaneseq
        %v813 = vshrl.u32 %v812, 7
        %v814 = vsub.s32 %v811, %v813
        %v815 = vrot.slane %v808, %v814
        %v817 = vlaneseq
        %vm818 = vcmp.ge.s32.totalorder %v817, 0
        %vm819 = vcmp.lt.s32.totalorder %v817, 512
        %vm820 = vmand %vm818, %vm819
        %821 = vst.msk [vmem:[%s454] sm:$0xf] %vm820, %v815
        %s822 = sand.u32 %s103, 1
        %s823 = scalar_lea.sflag [#allocation6], %s822
        %s824 = sand.u32 %s103, 1
        %s825 = smul.addr %s824, 4
        %s826 = scalar_lea.vmem [#allocation5], %s825
        // Predicated region
        $region102: #{ote_score.1} parent=88 // pred_check
          %p827 = pneg %p113
        $region103: #{ote_score.1} parent=88 // pred_check_branch
          %829 = sbr.rel (%p827) target = $region105
        $region104: #{ote_score.1} parent=88 // pred_region
          %s830 = smul.u32 4, %s17
          %s832 = ssub.s32 64, 64
          %833 = vsyncadd %s823, %s832
          %s834 = smul.addr %s830, 16
          %s835 = scalar_lea.hbm %s3, %s834
          %s837 = sshll.u32 %s826, 4
          %s838 = int_to_ptr.vmem [resolvable:$true] %s837
          %840 = dma.vmem_to_hbm [thread:$0]  %s838, 64, %s835, %s823
        $region105: #{ote_score.1} parent=88 // pred_fallthru
          _
      $region89: #{ote_score.1} parent=5 // pred_fallthru
        _
      %p841 = scmp.le.s32.totalorder 2, %s12
      // Predicated region
      $region106: #{ote_score.1} parent=5 // pred_check
        %p842 = pneg %p841
      $region107: #{ote_score.1} parent=5 // pred_check_branch
        %844 = sbr.rel (%p842) target = $region109
      $region108: #{ote_score.1} parent=5 // pred_region
        %s845 = ssub.s32 %s12, 2
        // Predicated region
        $region110: #{ote_score.1} parent=108 // pred_check
          %p846 = pneg %p119
        $region111: #{ote_score.1} parent=108 // pred_check_branch
          %848 = sbr.rel (%p846) target = $region113
        $region112: #{ote_score.1} parent=108 // pred_region
          %s849 = sand.u32 %s104, 1
          %s850 = scalar_lea.sflag [#allocation6], %s849
          %s851 = sand.u32 %s104, 1
          %s852 = smul.addr %s851, 4
          %s853 = scalar_lea.vmem [#allocation5], %s852
          %854 = dma.done %s850, 64
        $region113: #{ote_score.1} parent=108 // pred_fallthru
          _
      $region109: #{ote_score.1} parent=5 // pred_fallthru
        _
    $region6: #{ote_score.1} parent=1 // loop_footer
      %s16 = sadd.s32 1, %s12
    $region7: #{ote_score.1} parent=1 // loop_footer_branch
      %11 = sbr.rel target = $region3
    $region8: #{ote_score.1} parent=1 // loop_exit
      _
    %855 = vsyncpa [#allocation6], 1
    %s856 = scalar_lea.sflag [#allocation6], 1
    %857 = vsyncpa %s856, 1

</llo_original>
